<compile_context>
chip_gen: v7x
topology: tpu7x:2x2x1
jax: 0.10.0
libtpu: 0.0.40
codegen_flags: <defaults>
</compile_context>

<pallas_src>
from functools import partial

import jax
import jax.numpy as jnp
from jax.experimental import pallas as pl
from jax.experimental.pallas import tpu as pltpu

_MIB = 1024 * 1024


def _round_down(x: int, m: int) -> int:
    return (x // m) * m


def _sublane_rows(dtype) -> int:
    # Rows per packed sublane tile for the dtype (32-bit: 8, 16-bit: 16, 8-bit: 32).
    return {4: 8, 2: 16, 1: 32}.get(jnp.dtype(dtype).itemsize, 8)


def _gap_kernel(x_ref, o_ref, *scratch,
                inv_t, t_total, t_tile, t_chunk, n_chunks, mask_tail, unroll):
    # x_ref : (Bb, Tt, D) input tile
    # o_ref : (Bb, D)     output tile (resident across the T grid axis)
    # scratch: () if the output dtype is f32 (accumulate in-place into o_ref),
    #          else (acc_ref,) with acc_ref a (Bb, D) f32 VMEM accumulator.
    acc_ref = scratch[0] if scratch else o_ref
    t = pl.program_id(1)
    d = x_ref.shape[-1]

    @pl.when(t == 0)
    def _init():
        acc_ref[...] = jnp.zeros_like(acc_ref)

    base = t * t_tile  # first sequence row covered by this tile

    def _accum_at(start):
        xc = x_ref[:, pl.ds(start, t_chunk), :]
        if mask_tail:
            # Zero out rows past the true sequence length T (tail block holds
            # stale / undefined data beyond the array bound).
            seq = base + start + jax.lax.broadcasted_iota(jnp.int32, (t_chunk, d), 0)
            xc = jnp.where(seq < t_total, xc, jnp.zeros_like(xc))
        acc_ref[...] += jnp.sum(xc, axis=1, dtype=jnp.float32)

    if n_chunks == 1:
        _accum_at(0)
    else:
        def _body(c, carry):
            _accum_at(pl.multiple_of(c * t_chunk, t_chunk))
            return carry
        jax.lax.fori_loop(0, n_chunks, _body, 0, unroll=unroll)

    @pl.when(t == pl.num_programs(1) - 1)
    def _finalize():
        o_ref[...] = (acc_ref[...] * inv_t).astype(o_ref.dtype)


def global_avg_pooling(x: jax.Array, *, min_pallas_bytes: int = 256 * 1024) -> jax.Array:
    """Mean over axis 1 of a (B, T, D) array -> (B, D)."""
    B, T, D = x.shape
    itemsize = jnp.dtype(x.dtype).itemsize

    # Tiny inputs: pipeline setup (~µs) dominates; XLA's fused reduce wins.
    if B * T * D * itemsize < min_pallas_bytes:
        return jnp.mean(x.astype(jnp.float32), axis=1).astype(x.dtype)

    # ---- chip-aware VMEM budget ---------------------------------------------
    try:
        vmem_cap = int(getattr(pltpu.get_tpu_info(), "vmem_capacity_bytes", 64 * _MIB))
    except Exception:
        vmem_cap = 64 * _MIB  # conservative (v7x per-TC) fallback
    vmem_limit = min((vmem_cap * 3) // 4, 96 * _MIB)   # ~48 MiB on v7x, 96 MiB on v5e/v6e
    per_buf = min(16 * _MIB, vmem_limit // 4)           # per double-buffered input buffer

    # ---- batch tile -----------------------------------------------------------
    sub = _sublane_rows(x.dtype)
    # >= 2 batch grid steps when B allows, so v7x megacore splits work across TCs.
    Bb = sub if B >= 2 * sub else B
    # TODO(synk): for B < 2*sub on v7x, split the T reduction across the two
    # TensorCores (per-core partial sums added in the wrapper) instead.
    grid_b = pl.cdiv(B, Bb)
    out_rows = grid_b * Bb  # overrun rows (if any) are sliced away below

    # ---- sequence tile / in-tile chunking -------------------------------------
    row_bytes_in = Bb * D * itemsize
    row_bytes_f32 = Bb * D * 4
    # Inner accumulation chunk: keep any f32 upcast temp to ~<=512 KiB of VMEM.
    chunk_rows = max(sub, _round_down((512 * 1024) // max(row_bytes_f32, 1), sub))
    # Rows per streamed input block (multiple of chunk_rows, bounded by per_buf).
    max_tt = max(chunk_rows, _round_down(per_buf // max(row_bytes_in, 1), chunk_rows))

    if T <= chunk_rows:
        # Single small block covering all of T (full-dim block, no alignment rule).
        Tt, t_chunk, n_chunks, grid_t, mask_tail = T, T, 1, 1, False
    else:
        Tt = max(chunk_rows, _round_down(min(T, max_tt), chunk_rows))
        t_chunk = chunk_rows
        n_chunks = Tt // t_chunk
        grid_t = pl.cdiv(T, Tt)
        mask_tail = (T % Tt) != 0

    # ---- accumulator placement -------------------------------------------------
    acc_in_out = jnp.dtype(x.dtype) == jnp.dtype(jnp.float32)
    scratch_shapes = [] if acc_in_out else [pltpu.VMEM((Bb, D), jnp.float32)]

    kernel = partial(
        _gap_kernel,
        inv_t=1.0 / T,          # scale by the ORIGINAL (unpadded) T
        t_total=T,
        t_tile=Tt,
        t_chunk=t_chunk,
        n_chunks=n_chunks,
        mask_tail=mask_tail,
        unroll=(n_chunks <= 8),
    )

    out = pl.pallas_call(
        kernel,
        out_shape=jax.ShapeDtypeStruct((out_rows, D), x.dtype),
        grid_spec=pltpu.PrefetchScalarGridSpec(
            num_scalar_prefetch=0,
            grid=(grid_b, grid_t),
            in_specs=[pl.BlockSpec((Bb, Tt, D), lambda b, t: (b, t, 0))],
            out_specs=pl.BlockSpec((Bb, D), lambda b, t: (b, 0)),
            scratch_shapes=scratch_shapes,
        ),
        compiler_params=pltpu.CompilerParams(
            dimension_semantics=("parallel", "arbitrary"),
            vmem_limit_bytes=int(vmem_limit),
        ),
        cost_estimate=pl.CostEstimate(
            flops=B * T * D,
            transcendentals=0,
            bytes_accessed=B * T * D * itemsize + B * D * itemsize,
        ),
    )(x)

    if out_rows != B:
        out = out[:B]
    return out


if __name__ == "__main__":
    key = jax.random.PRNGKey(0)
    k1, k2, k3 = jax.random.split(key, 3)

    # Primary small-shape check (matches the module's (B, T, D) input);
    # force the Pallas path so the kernel itself is exercised.
    B, T, D = 2, 8, 32
    x = jax.random.normal(k1, (B, T, D), dtype=jnp.float32)
    out = jax.block_until_ready(global_avg_pooling(x, min_pallas_bytes=0))
    ref = jnp.mean(x, axis=1)
    assert out.shape == (B, D)
    assert jnp.allclose(out, ref, atol=1e-5, rtol=1e-5)

    # Ragged shape: non-128 D, odd T and B, handled without any host-side padding.
    B2, T2, D2 = 10, 9, 40
    x2 = jax.random.normal(k2, (B2, T2, D2), dtype=jnp.float32)
    out2 = jax.block_until_ready(global_avg_pooling(x2, min_pallas_bytes=0))
    ref2 = jnp.mean(x2, axis=1)
    assert out2.shape == (B2, D2)
    assert jnp.allclose(out2, ref2, atol=1e-5, rtol=1e-5)

    # Larger shape: exercises T tiling + in-kernel tail masking + an
    # overrunning tail batch block (rows sliced away) + chunked accumulation.
    B3, T3, D3 = 18, 1003, 256
    x3 = jax.random.normal(k3, (B3, T3, D3), dtype=jnp.float32)
    out3 = jax.block_until_ready(global_avg_pooling(x3))
    ref3 = jnp.mean(x3, axis=1)
    assert out3.shape == (B3, D3)
    assert jnp.allclose(out3, ref3, atol=1e-4, rtol=1e-4)

    print("KERNEL_OK")
</pallas_src>

<mosaic_0001>
module attributes {stable_mosaic.version = 11 : i64} {
  func.func @_gap_kernel(%arg0: i32, %arg1: i32, %arg2: memref<2x8x32xf32, #tpu.memory_space<vmem>>, %arg3: memref<2x32xf32, #tpu.memory_space<vmem>>) attributes {dimension_semantics = [#tpu.dimension_semantics<parallel>, #tpu.dimension_semantics<arbitrary>], iteration_bounds = array<i64: 1, 1>, scalar_prefetch = 0 : i64, scratch_operands = 0 : i64, tpu.core_type = #tpu.core_type<tc>, window_params = [{transform_indices = @transform_0, window_bounds = array<i64: 2, 8, 32>}, {transform_indices = @transform_1, window_bounds = array<i64: 2, 32>}]} {
    %c0_i32 = arith.constant 0 : i32
    %0 = arith.cmpi eq, %arg1, %c0_i32 : i32
    %1 = arith.extui %0 : i1 to i32
    %c0_i32_0 = arith.constant 0 : i32
    %2 = arith.cmpi ne, %1, %c0_i32_0 : i32
    scf.if %2 {
      %cst_9 = arith.constant 0.000000e+00 : f32
      %11 = vector.broadcast %cst_9 : f32 to vector<2x32xf32>
      %c0_10 = arith.constant 0 : index
      %c0_11 = arith.constant 0 : index
      %12 = vector.load %arg3[%c0_10, %c0_11] : memref<2x32xf32, #tpu.memory_space<vmem>>, vector<2x32xf32>
      tpu.vector_store %arg3[%c0_10, %c0_11], %11 {strides = array<i32>} : memref<2x32xf32, #tpu.memory_space<vmem>>, vector<2x32xf32>,
    } else {
    }
    %c0 = arith.constant 0 : index
    %c0_1 = arith.constant 0 : index
    %c0_2 = arith.constant 0 : index
    %3 = vector.load %arg2[%c0, %c0_1, %c0_2] : memref<2x8x32xf32, #tpu.memory_space<vmem>>, vector<2x8x32xf32>
    %c0_3 = arith.constant 0 : index
    %c0_4 = arith.constant 0 : index
    %4 = vector.load %arg3[%c0_3, %c0_4] : memref<2x32xf32, #tpu.memory_space<vmem>>, vector<2x32xf32>
    %cst = arith.constant dense<0.000000e+00> : vector<2x32xf32>
    %5 = vector.multi_reduction <add>, %3, %cst [1] : vector<2x8x32xf32> to vector<2x32xf32>
    %6 = arith.addf %4, %5 : vector<2x32xf32>
    %c0_5 = arith.constant 0 : index
    %c0_6 = arith.constant 0 : index
    %7 = vector.load %arg3[%c0_5, %c0_6] : memref<2x32xf32, #tpu.memory_space<vmem>>, vector<2x32xf32>
    tpu.vector_store %arg3[%c0_5, %c0_6], %6 {strides = array<i32>} : memref<2x32xf32, #tpu.memory_space<vmem>>, vector<2x32xf32>,
    %c0_i32_7 = arith.constant 0 : i32
    %8 = arith.cmpi eq, %arg1, %c0_i32_7 : i32
    %9 = arith.extui %8 : i1 to i32
    %c0_i32_8 = arith.constant 0 : i32
    %10 = arith.cmpi ne, %9, %c0_i32_8 : i32
    scf.if %10 {
      %c0_9 = arith.constant 0 : index
      %c0_10 = arith.constant 0 : index
      %11 = vector.load %arg3[%c0_9, %c0_10] : memref<2x32xf32, #tpu.memory_space<vmem>>, vector<2x32xf32>
      %cst_11 = arith.constant 1.250000e-01 : f32
      %12 = vector.broadcast %cst_11 : f32 to vector<2x32xf32>
      %13 = arith.mulf %11, %12 : vector<2x32xf32>
      %c0_12 = arith.constant 0 : index
      %c0_13 = arith.constant 0 : index
      %14 = vector.load %arg3[%c0_12, %c0_13] : memref<2x32xf32, #tpu.memory_space<vmem>>, vector<2x32xf32>
      tpu.vector_store %arg3[%c0_12, %c0_13], %13 {strides = array<i32>} : memref<2x32xf32, #tpu.memory_space<vmem>>, vector<2x32xf32>,
    } else {
    }
    return
  }
  func.func @transform_0(%arg0: i32, %arg1: i32) -> (i32, i32, i32) {
    %c0_i32 = arith.constant 0 : i32
    %c0_i32_0 = arith.constant 0 : i32
    return %arg0, %arg1, %c0_i32 : i32, i32, i32
  }
  func.func @transform_1(%arg0: i32, %arg1: i32) -> (i32, i32) {
    %c0_i32 = arith.constant 0 : i32
    %c0_i32_0 = arith.constant 0 : i32
    return %arg0, %c0_i32 : i32, i32
  }
}

</mosaic_0001>

<llo_original>
// kernel: tpu_custom_call.1
$region0: #{tpu_custom_call.1}
  #allocation0 [shape = 'u32[]', space=smem, size = 0x4, offset = 0x4, fixed_abs, tag = 'smem constant byte address 0x4 - core index']
  #allocation1 [shape = 'u32[144,128]{1,0:T(1,128)}', space=vmem, size = 0x12000, scoped, tag = 'internal scratch']
  %s0 = inlined_call_operand.hbm [shape: f32[2,8,32], index: 0, kind: input, shape index: {}]
  %s1 = inlined_call_operand.hbm [shape: f32[2,32], index: 1, kind: output, shape index: {}]
  %s2 = sld [smem:[#allocation0]]
  $region26: #{tpu_custom_call.1} parent=0
    _
  %s4 = ssub.s32 1, %s2
  %s5 = scalar_select 0, %s4, %s2
  $region1: #{tpu_custom_call.1} parent=0
    #allocation2 [shape = 'u8[8192]{0}', space=vmem, size = 0x2000, scoped, tag = 'input window, operand 0, single buffered']
    #allocation3 [shape = 's32[1]{0}', space=sflag, size = 0x4, scoped, tag = 'scoped memory for tpu_custom_call.1']
    #allocation4 [shape = 's32[1]{0}', space=sflag, size = 0x4, scoped, tag = 'scoped memory for tpu_custom_call.1']
    #allocation5 [shape = 'u8[1024]{0}', space=vmem, size = 0x400, scoped, tag = 'output window, operand 0, single buffered']
    %6 = vsyncpa [#allocation3], 0
    %7 = vsyncpa [#allocation4], 0
    // Predicated region
    $region2: #{tpu_custom_call.1} parent=1 // pred_check
      _
    $region3: #{tpu_custom_call.1} parent=1 // pred_check_branch
      %9 = sbr.rel (0) target = $region5
    $region4: #{tpu_custom_call.1} parent=1 // pred_region
      %s11 = ssub.s32 256, 256
      %12 = vsyncadd [#allocation3], %s11
      %s13 = sshll.u32 [#allocation2], 4
      %s14 = int_to_ptr.vmem [resolvable:$true] %s13
      %19 = dma.hbm_to_vmem [thread:$0]  %s0, 256, %s14, [#allocation3], 128, 128, 8
    $region5: #{tpu_custom_call.1} parent=1 // pred_fallthru
      _
    // Predicated region
    $region6: #{tpu_custom_call.1} parent=1 // pred_check
      _
    $region7: #{tpu_custom_call.1} parent=1 // pred_check_branch
      %21 = sbr.rel (0) target = $region9
    $region8: #{tpu_custom_call.1} parent=1 // pred_region
      %22 = dma.done [#allocation3], 256
    $region9: #{tpu_custom_call.1} parent=1 // pred_fallthru
      _
    %p23 = scmp.eq.s32.totalorder 0, 0
    // Predicated region
    $region10: #{tpu_custom_call.1} parent=1 // pred_check
      %p24 = pneg %p23
    $region11: #{tpu_custom_call.1} parent=1 // pred_check_branch
      %26 = sbr.rel (%p24) target = $region13
    $region12: #{tpu_custom_call.1} parent=1 // pred_region
      %vm27 = vcmask 254976
      %28 = vst.msk [vmem:[#allocation5] sm:$0x3] %vm27, 0.0
    $region13: #{tpu_custom_call.1} parent=1 // pred_fallthru
      _
    %v29 = vld [vmem:[#allocation2] sm:$0xff]
    %v30 = vld [vmem:[#allocation2 + $0x8] sm:$0xff]
    %v31 = vld [vmem:[#allocation5] sm:$0x3]
    %vm32 = vcmask 261120
    %v33 = vsel %vm32, %v29, 0.0
    %v34 = vrot.slane %v33, 4
    %v35 = vadd.f32 %v33, %v34
    %v36 = vrot.slane %v35, 2
    %v37 = vadd.f32 %v35, %v36
    %v38 = vrot.slane %v37, 1
    %v39 = vadd.f32 %v37, %v38
    %v40 = vsel %vm32, %v30, 0.0
    %v41 = vrot.slane %v40, 4
    %v42 = vadd.f32 %v40, %v41
    %v43 = vrot.slane %v42, 2
    %v44 = vadd.f32 %v42, %v43
    %v45 = vrot.slane %v44, 1
    %v46 = vadd.f32 %v44, %v45
    %vm49 = vcmask 1041409
    %v50 = vsel %vm49, %v46, %v39
    %v52 = vadd.f32 %v31, %v50
    %vm53 = vcmask 254976
    %54 = vst.msk [vmem:[#allocation5] sm:$0x3] %vm53, %v52
    // Predicated region
    $region14: #{tpu_custom_call.1} parent=1 // pred_check
      %p55 = pneg %p23
    $region15: #{tpu_custom_call.1} parent=1 // pred_check_branch
      %57 = sbr.rel (%p55) target = $region17
    $region16: #{tpu_custom_call.1} parent=1 // pred_region
      %v58 = vld [vmem:[#allocation5] sm:$0x3]
      %v59 = vmul.f32 %v58, 0.125
      %60 = vst.msk [vmem:[#allocation5] sm:$0x3] %vm53, %v59
    $region17: #{tpu_custom_call.1} parent=1 // pred_fallthru
      _
    // Predicated region
    $region18: #{tpu_custom_call.1} parent=1 // pred_check
      _
    $region19: #{tpu_custom_call.1} parent=1 // pred_check_branch
      %62 = sbr.rel (0) target = $region21
    $region20: #{tpu_custom_call.1} parent=1 // pred_region
      %s64 = ssub.s32 32, 32
      %65 = vsyncadd [#allocation4], %s64
      %s67 = sshll.u32 [#allocation5], 4
      %s68 = int_to_ptr.vmem [resolvable:$true] %s67
      %70 = dma.vmem_to_hbm [thread:$0]  %s68, 32, %s1, [#allocation4]
    $region21: #{tpu_custom_call.1} parent=1 // pred_fallthru
      _
    // Predicated region
    $region22: #{tpu_custom_call.1} parent=1 // pred_check
      _
    $region23: #{tpu_custom_call.1} parent=1 // pred_check_branch
      %72 = sbr.rel (0) target = $region25
    $region24: #{tpu_custom_call.1} parent=1 // pred_region
      %73 = dma.done [#allocation4], 32
    $region25: #{tpu_custom_call.1} parent=1 // pred_fallthru
      _
    %74 = vsyncpa [#allocation3], 1
    %75 = vsyncpa [#allocation4], 1

</llo_original>
